<compile_context>
chip_gen: v6e
topology: v6e:2x2x1
jax: 0.10.0
libtpu: 0.0.40
codegen_flags: <defaults>
</compile_context>

<pallas_src>
import functools

import jax
import jax.numpy as jnp
from jax.experimental import pallas as pl
from jax.experimental.pallas import tpu as pltpu


def _fcos_level_kernel(imsize_ref,           # SMEM prefetch (N, 2) int32 [h, w]
                       cls_ref,              # (1, C, T)
                       reg_ref,              # (1, 4, T)
                       ctr_ref,              # (1, 1, T)
                       loc_ref,              # (4, T)  rows = [x; y; x; y]
                       scores_ref,           # out (1, C, T): masked sqrt(cls_p*ctr_p)
                       boxes_ref,            # out (1, 4, T): [x1; y1; x2; y2], clipped
                       *, pre_nms_thresh):
    i = pl.program_id(0)

    cls = cls_ref[0].astype(jnp.float32)     # (C, T)
    reg = reg_ref[0].astype(jnp.float32)     # (4, T)
    ctr = ctr_ref[0].astype(jnp.float32)     # (1, T)
    loc4 = loc_ref[...].astype(jnp.float32)  # (4, T)

    sig_cls = jax.nn.sigmoid(cls)
    sig_ctr = jax.nn.sigmoid(ctr)

    # candidate_inds = sigmoid(cls) > pre_nms_thresh; scores = sqrt(cls_p * ctr_p).
    # The candidate mask is fused into the scores (non-candidates -> exactly 0),
    # so downstream code recovers the mask / candidate count as (score > 0).
    # Candidate scores are strictly positive barring f32 sigmoid underflow
    # (logits < ~-100), which is negligible.
    cand = sig_cls > pre_nms_thresh
    scores = jnp.sqrt(sig_cls * sig_ctr)                     # (C,T) * (1,T) broadcast
    scores_ref[0] = jnp.where(cand, scores, 0.0).astype(scores_ref.dtype)

    # detections = [x - l, y - t, x + r, y + b]; clip_to_image with TO_REMOVE = 1.
    h = imsize_ref[i, 0].astype(jnp.float32)
    w = imsize_ref[i, 1].astype(jnp.float32)

    row = jax.lax.broadcasted_iota(jnp.int32, (4, 1), 0)
    sign = jnp.where(row < 2, -1.0, 1.0)                     # [-1, -1, +1, +1]
    hi = jnp.where(row % 2 == 0, w - 1.0, h - 1.0)           # [w-1, h-1, w-1, h-1]

    box = loc4 + sign * reg                                  # (4, T) single FMA
    box = jnp.minimum(jnp.maximum(box, 0.0), hi)
    boxes_ref[0] = box.astype(boxes_ref.dtype)


def fcos_level_pallas(locations, box_cls, box_regression, centerness,
                      image_sizes, *, pre_nms_thresh, tile_hw=2048):
    """Dense per-level FCOS post-processing hot path (one pallas_call).

    Returns:
      masked_scores: (N, C, HW)  sqrt(sigmoid(cls) * sigmoid(ctr)) where
                     sigmoid(cls) > pre_nms_thresh, else 0.  dtype == box_cls.dtype.
      boxes:         (N, 4, HW)  decoded, image-clipped [x1, y1, x2, y2] (f32).
    """
    N, C, H, W = box_cls.shape
    HW = H * W

    # NCHW already has H*W contiguous on the minor axis — pure reshape, no transpose.
    cls = box_cls.reshape(N, C, HW)
    reg = box_regression.reshape(N, 4, HW)
    ctr = centerness.reshape(N, 1, HW)
    loc_t = jnp.transpose(locations.astype(jnp.float32), (1, 0))      # (2, HW), tiny
    loc4 = jnp.concatenate([loc_t, loc_t], axis=0)                    # (4, HW) [x;y;x;y]
    imsz = image_sizes.astype(jnp.int32)

    # Spatial tile: full HW if small, otherwise a multiple of 128 lanes.
    if HW <= tile_hw:
        tile = HW
    else:
        tile = max(128, (tile_hw // 128) * 128)
    num_tiles = pl.cdiv(HW, tile)

    kernel = functools.partial(_fcos_level_kernel,
                               pre_nms_thresh=float(pre_nms_thresh))

    # bf16 inputs -> bf16 scores writeback (halves the dominant HBM write).
    score_dtype = box_cls.dtype

    grid_spec = pltpu.PrefetchScalarGridSpec(
        num_scalar_prefetch=1,
        grid=(N, num_tiles),
        in_specs=[
            pl.BlockSpec((1, C, tile), lambda i, t, im: (i, 0, t)),
            pl.BlockSpec((1, 4, tile), lambda i, t, im: (i, 0, t)),
            pl.BlockSpec((1, 1, tile), lambda i, t, im: (i, 0, t)),
            pl.BlockSpec((4, tile), lambda i, t, im: (0, t)),
        ],
        out_specs=[
            pl.BlockSpec((1, C, tile), lambda i, t, im: (i, 0, t)),
            pl.BlockSpec((1, 4, tile), lambda i, t, im: (i, 0, t)),
        ],
    )

    out_shape = (
        jax.ShapeDtypeStruct((N, C, HW), score_dtype),   # masked scores
        jax.ShapeDtypeStruct((N, 4, HW), jnp.float32),   # decoded + clipped boxes
    )

    return pl.pallas_call(
        kernel,
        out_shape=out_shape,
        grid_spec=grid_spec,
        compiler_params=pltpu.CompilerParams(
            dimension_semantics=("parallel", "parallel"),
            vmem_limit_bytes=32 * 1024 * 1024,
        ),
    )(imsz, cls, reg, ctr, loc4)


class FCOSPostProcessorPallas:
    """JAX/Pallas counterpart of FCOSPostProcessor (dense/padded results)."""

    def __init__(self, pre_nms_thresh, pre_nms_top_n, nms_thresh,
                 fpn_post_nms_top_n, min_size, num_classes,
                 bbox_aug_enabled=False):
        self.pre_nms_thresh = pre_nms_thresh
        self.pre_nms_top_n = pre_nms_top_n
        self.nms_thresh = nms_thresh
        self.fpn_post_nms_top_n = fpn_post_nms_top_n
        self.min_size = min_size
        self.num_classes = num_classes
        self.bbox_aug_enabled = bbox_aug_enabled

    def forward_for_single_feature_map(self, locations, box_cls,
                                       box_regression, centerness, image_sizes):
        masked, boxes = fcos_level_pallas(
            locations, box_cls, box_regression, centerness, image_sizes,
            pre_nms_thresh=self.pre_nms_thresh,
        )
        N, C, HW = masked.shape
        k = min(self.pre_nms_top_n, HW * C)

        # Padded emulation of the torch nonzero-gather + per-image topk (dynamic
        # shapes in torch).  Flat index = class * HW + location.  topk over the
        # masked (pre-sqrt-equivalent) scores selects the same set as torch since
        # sqrt is monotone and non-candidates are exactly 0.
        flat = masked.reshape(N, C * HW).astype(jnp.float32)
        top_scores, top_idx = jax.lax.top_k(flat, k)                  # (N, k)
        top_cls = top_idx // HW + 1                                   # labels = class + 1
        top_loc = top_idx % HW

        # pre_nms_top_n = candidate_inds.sum(1).clamp(max=pre_nms_top_n).
        # Since candidates are exactly the strictly-positive scores and k ==
        # min(pre_nms_top_n, C*HW), min(#candidates, pre_nms_top_n) equals the
        # number of positive entries in the top-k — no extra pass over (N,C,HW).
        count = jnp.sum((top_scores > 0).astype(jnp.int32), axis=1)

        top_boxes = jnp.take_along_axis(boxes, top_loc[:, None, :], axis=2)  # (N, 4, k)
        top_boxes = jnp.transpose(top_boxes, (0, 2, 1))                      # (N, k, 4)

        # remove_small_boxes applied to the gathered top-k only (matches torch
        # ordering: topk over candidates first, small-box filter afterwards).
        ws = top_boxes[..., 2] - top_boxes[..., 0] + 1.0
        hs = top_boxes[..., 3] - top_boxes[..., 1] + 1.0
        keep = (ws >= self.min_size) & (hs >= self.min_size)

        # Entries past the true candidate count have score == 0 and garbage boxes;
        # `valid` marks them.  (score-exactly-0 vs below-threshold ambiguity is
        # negligible — see kernel comment.)
        valid = (top_scores > 0) & keep

        return {
            "boxes": top_boxes,                 # (N, k, 4)
            "scores": top_scores,               # (N, k)
            "labels": top_cls.astype(jnp.int32),
            "valid": valid,
            "pre_nms_top_n": count,             # (N,)
        }

    def forward(self, locations, box_cls, box_regression, centerness, image_sizes):
        per_level = [
            self.forward_for_single_feature_map(l, o, b, c, image_sizes)
            for l, o, b, c in zip(locations, box_cls, box_regression, centerness)
        ]
        out = {
            "boxes": jnp.concatenate([p["boxes"] for p in per_level], axis=1),
            "scores": jnp.concatenate([p["scores"] for p in per_level], axis=1),
            "labels": jnp.concatenate([p["labels"] for p in per_level], axis=1),
            "valid": jnp.concatenate([p["valid"] for p in per_level], axis=1),
            "pre_nms_top_n": jnp.stack([p["pre_nms_top_n"] for p in per_level], axis=1),
        }
        # TODO(synk): boxlist_ml_nms + kthvalue-based fpn_post_nms_top_n filtering are
        # data-dependent (dynamic output shapes) and have no clean Pallas equivalent.
        return out


def _make_locations(h, w, stride):
    ys = (jnp.arange(h, dtype=jnp.float32) + 0.5) * stride
    xs = (jnp.arange(w, dtype=jnp.float32) + 0.5) * stride
    yy, xx = jnp.meshgrid(ys, xs, indexing="ij")
    return jnp.stack([xx.reshape(-1), yy.reshape(-1)], axis=1)       # (H*W, 2) [x, y]


if __name__ == "__main__":
    key = jax.random.PRNGKey(0)
    N, C = 2, 4                      # batch, class channels (num_classes - 1)
    level_shapes = [(16, 16, 8), (8, 8, 16)]   # (H, W, stride) per FPN level

    keys = jax.random.split(key, 3 * len(level_shapes))
    locations, box_cls, box_reg, ctr = [], [], [], []
    for li, (H, W, stride) in enumerate(level_shapes):
        k0, k1, k2 = keys[3 * li], keys[3 * li + 1], keys[3 * li + 2]
        locations.append(_make_locations(H, W, stride))
        box_cls.append(jax.random.normal(k0, (N, C, H, W), jnp.float32))
        box_reg.append(4.0 * jnp.abs(jax.random.normal(k1, (N, 4, H, W), jnp.float32)))
        ctr.append(jax.random.normal(k2, (N, 1, H, W), jnp.float32))

    image_sizes = jnp.array([[120, 128], [100, 112]], dtype=jnp.int32)  # (h, w) per image

    post = FCOSPostProcessorPallas(
        pre_nms_thresh=0.3,
        pre_nms_top_n=50,
        nms_thresh=0.6,
        fpn_post_nms_top_n=100,
        min_size=0,
        num_classes=C + 1,
    )

    out = post.forward(locations, box_cls, box_reg, ctr, image_sizes)
    jax.block_until_ready(out)

    assert out["boxes"].shape == (N, 100, 4)
    assert out["scores"].shape == (N, 100)
    assert out["labels"].shape == (N, 100)
    assert out["pre_nms_top_n"].shape == (N, len(level_shapes))
    print("KERNEL_OK")
</pallas_src>

<mosaic_0001>
module attributes {stable_mosaic.version = 11 : i64} {
  func.func @_fcos_level_kernel(%arg0: i32, %arg1: i32, %arg2: memref<2x2xi32, #tpu.memory_space<smem>>, %arg3: memref<1x4x256xf32, #tpu.memory_space<vmem>>, %arg4: memref<1x4x256xf32, #tpu.memory_space<vmem>>, %arg5: memref<1x1x256xf32, #tpu.memory_space<vmem>>, %arg6: memref<4x256xf32, #tpu.memory_space<vmem>>, %arg7: memref<1x4x256xf32, #tpu.memory_space<vmem>>, %arg8: memref<1x4x256xf32, #tpu.memory_space<vmem>>) attributes {dimension_semantics = [#tpu.dimension_semantics<parallel>, #tpu.dimension_semantics<parallel>], iteration_bounds = array<i64: 2, 1>, scalar_prefetch = 1 : i64, scratch_operands = 0 : i64, tpu.core_type = #tpu.core_type<tc>, window_params = [{transform_indices = @transform_0, window_bounds = array<i64: 1, 4, 256>}, {transform_indices = @transform_1, window_bounds = array<i64: 1, 4, 256>}, {transform_indices = @transform_2, window_bounds = array<i64: 1, 1, 256>}, {transform_indices = @transform_3, window_bounds = array<i64: 4, 256>}, {transform_indices = @transform_4, window_bounds = array<i64: 1, 4, 256>}, {transform_indices = @transform_5, window_bounds = array<i64: 1, 4, 256>}]} {
    %c0 = arith.constant 0 : index
    %c0_0 = arith.constant 0 : index
    %c0_1 = arith.constant 0 : index
    %0 = vector.load %arg3[%c0, %c0_0, %c0_1] : memref<1x4x256xf32, #tpu.memory_space<vmem>>, vector<1x4x256xf32>
    %1 = vector.shape_cast %0 : vector<1x4x256xf32> to vector<4x256xf32>
    %c0_2 = arith.constant 0 : index
    %c0_3 = arith.constant 0 : index
    %c0_4 = arith.constant 0 : index
    %2 = vector.load %arg4[%c0_2, %c0_3, %c0_4] : memref<1x4x256xf32, #tpu.memory_space<vmem>>, vector<1x4x256xf32>
    %3 = vector.shape_cast %2 : vector<1x4x256xf32> to vector<4x256xf32>
    %c0_5 = arith.constant 0 : index
    %c0_6 = arith.constant 0 : index
    %c0_7 = arith.constant 0 : index
    %4 = vector.load %arg5[%c0_5, %c0_6, %c0_7] : memref<1x1x256xf32, #tpu.memory_space<vmem>>, vector<1x1x256xf32>
    %5 = vector.shape_cast %4 : vector<1x1x256xf32> to vector<1x256xf32>
    %c0_8 = arith.constant 0 : index
    %c0_9 = arith.constant 0 : index
    %6 = vector.load %arg6[%c0_8, %c0_9] : memref<4x256xf32, #tpu.memory_space<vmem>>, vector<4x256xf32>
    %7 = arith.negf %1 : vector<4x256xf32>
    %8 = math.exp %7 : vector<4x256xf32>
    %cst = arith.constant 1.000000e+00 : f32
    %9 = vector.broadcast %cst : f32 to vector<4x256xf32>
    %10 = arith.addf %9, %8 : vector<4x256xf32>
    %11 = arith.divf %9, %10 : vector<4x256xf32>
    %12 = arith.negf %5 : vector<1x256xf32>
    %13 = math.exp %12 : vector<1x256xf32>
    %cst_10 = arith.constant 1.000000e+00 : f32
    %14 = vector.broadcast %cst_10 : f32 to vector<1x256xf32>
    %15 = arith.addf %14, %13 : vector<1x256xf32>
    %16 = arith.divf %14, %15 : vector<1x256xf32>
    %cst_11 = arith.constant 3.000000e-01 : f32
    %17 = vector.broadcast %cst_11 : f32 to vector<4x256xf32>
    %18 = arith.cmpf ogt, %11, %17 : vector<4x256xf32>
    %19 = vector.broadcast %16 : vector<1x256xf32> to vector<4x256xf32>
    %20 = arith.mulf %11, %19 : vector<4x256xf32>
    %21 = math.sqrt %20 : vector<4x256xf32>
    %cst_12 = arith.constant 0.000000e+00 : f32
    %22 = vector.broadcast %cst_12 : f32 to vector<4x256xf32>
    %23 = arith.select %18, %21, %22 : vector<4x256xi1>, vector<4x256xf32>
    %c0_13 = arith.constant 0 : index
    %c0_14 = arith.constant 0 : index
    %c0_15 = arith.constant 0 : index
    %24 = vector.load %arg7[%c0_13, %c0_14, %c0_15] : memref<1x4x256xf32, #tpu.memory_space<vmem>>, vector<1x4x256xf32>
    %25 = vector.shape_cast %24 : vector<1x4x256xf32> to vector<4x256xf32>
    %26 = vector.shape_cast %23 : vector<4x256xf32> to vector<1x4x256xf32>
    tpu.vector_store %arg7[%c0_13, %c0_14, %c0_15], %26 {strides = array<i32>} : memref<1x4x256xf32, #tpu.memory_space<vmem>>, vector<1x4x256xf32>,
    %27 = arith.index_cast %arg0 : i32 to index
    %c0_16 = arith.constant 0 : index
    %28 = memref.load %arg2[%27, %c0_16] : memref<2x2xi32, #tpu.memory_space<smem>>
    %29 = arith.sitofp %28 : i32 to f32
    %30 = arith.index_cast %arg0 : i32 to index
    %c1 = arith.constant 1 : index
    %31 = memref.load %arg2[%30, %c1] : memref<2x2xi32, #tpu.memory_space<smem>>
    %32 = arith.sitofp %31 : i32 to f32
    %33 = tpu.iota {dimensions = array<i32: 0>} : vector<4x1xi32>
    %c2_i32 = arith.constant 2 : i32
    %34 = vector.broadcast %c2_i32 : i32 to vector<4x1xi32>
    %35 = arith.cmpi slt, %33, %34 : vector<4x1xi32>
    %cst_17 = arith.constant -1.000000e+00 : f32
    %cst_18 = arith.constant 1.000000e+00 : f32
    %36 = vector.broadcast %cst_17 : f32 to vector<4x1xf32>
    %37 = vector.broadcast %cst_18 : f32 to vector<4x1xf32>
    %38 = arith.select %35, %36, %37 : vector<4x1xi1>, vector<4x1xf32>
    %c2_i32_19 = arith.constant 2 : i32
    %c0_i32 = arith.constant 0 : i32
    %39 = arith.cmpi eq, %c2_i32_19, %c0_i32 : i32
    %c1_i32 = arith.constant 1 : i32
    %40 = arith.select %39, %c1_i32, %c2_i32_19 : i32
    %41 = vector.broadcast %40 : i32 to vector<4x1xi32>
    %42 = arith.remsi %33, %41 : vector<4x1xi32>
    %c0_i32_20 = arith.constant 0 : i32
    %43 = vector.broadcast %c0_i32_20 : i32 to vector<4x1xi32>
    %44 = arith.cmpi ne, %42, %43 : vector<4x1xi32>
    %c0_i32_21 = arith.constant 0 : i32
    %45 = vector.broadcast %c0_i32_21 : i32 to vector<4x1xi32>
    %46 = arith.cmpi slt, %42, %45 : vector<4x1xi32>
    %c0_i32_22 = arith.constant 0 : i32
    %47 = arith.cmpi slt, %40, %c0_i32_22 : i32
    %48 = vector.broadcast %47 : i1 to vector<4x1xi1>
    %49 = vector.broadcast %48 : vector<4x1xi1> to vector<4x1xi1>
    %50 = arith.xori %46, %49 : vector<4x1xi1>
    %51 = arith.andi %50, %44 : vector<4x1xi1>
    %52 = vector.broadcast %40 : i32 to vector<4x1xi32>
    %53 = arith.addi %42, %52 : vector<4x1xi32>
    %54 = arith.select %51, %53, %42 : vector<4x1xi1>, vector<4x1xi32>
    %c0_i32_23 = arith.constant 0 : i32
    %55 = vector.broadcast %c0_i32_23 : i32 to vector<4x1xi32>
    %56 = arith.cmpi eq, %54, %55 : vector<4x1xi32>
    %cst_24 = arith.constant 1.000000e+00 : f32
    %57 = arith.subf %32, %cst_24 : f32
    %cst_25 = arith.constant 1.000000e+00 : f32
    %58 = arith.subf %29, %cst_25 : f32
    %59 = vector.broadcast %57 : f32 to vector<4x1xf32>
    %60 = vector.broadcast %58 : f32 to vector<4x1xf32>
    %61 = arith.select %56, %59, %60 : vector<4x1xi1>, vector<4x1xf32>
    %62 = vector.broadcast %38 : vector<4x1xf32> to vector<4x256xf32>
    %63 = arith.mulf %62, %3 : vector<4x256xf32>
    %64 = arith.addf %6, %63 : vector<4x256xf32>
    %cst_26 = arith.constant 0.000000e+00 : f32
    %65 = vector.broadcast %cst_26 : f32 to vector<4x256xf32>
    %66 = arith.maximumf %64, %65 : vector<4x256xf32>
    %67 = vector.broadcast %61 : vector<4x1xf32> to vector<4x256xf32>
    %68 = arith.minimumf %66, %67 : vector<4x256xf32>
    %c0_27 = arith.constant 0 : index
    %c0_28 = arith.constant 0 : index
    %c0_29 = arith.constant 0 : index
    %69 = vector.load %arg8[%c0_27, %c0_28, %c0_29] : memref<1x4x256xf32, #tpu.memory_space<vmem>>, vector<1x4x256xf32>
    %70 = vector.shape_cast %69 : vector<1x4x256xf32> to vector<4x256xf32>
    %71 = vector.shape_cast %68 : vector<4x256xf32> to vector<1x4x256xf32>
    tpu.vector_store %arg8[%c0_27, %c0_28, %c0_29], %71 {strides = array<i32>} : memref<1x4x256xf32, #tpu.memory_space<vmem>>, vector<1x4x256xf32>,
    return
  }
  func.func @transform_0(%arg0: i32, %arg1: i32, %arg2: memref<2x2xi32, #tpu.memory_space<smem>>) -> (i32, i32, i32) {
    %c0_i32 = arith.constant 0 : i32
    %c0_i32_0 = arith.constant 0 : i32
    return %arg0, %c0_i32, %arg1 : i32, i32, i32
  }
  func.func @transform_1(%arg0: i32, %arg1: i32, %arg2: memref<2x2xi32, #tpu.memory_space<smem>>) -> (i32, i32, i32) {
    %c0_i32 = arith.constant 0 : i32
    %c0_i32_0 = arith.constant 0 : i32
    return %arg0, %c0_i32, %arg1 : i32, i32, i32
  }
  func.func @transform_2(%arg0: i32, %arg1: i32, %arg2: memref<2x2xi32, #tpu.memory_space<smem>>) -> (i32, i32, i32) {
    %c0_i32 = arith.constant 0 : i32
    %c0_i32_0 = arith.constant 0 : i32
    return %arg0, %c0_i32, %arg1 : i32, i32, i32
  }
  func.func @transform_3(%arg0: i32, %arg1: i32, %arg2: memref<2x2xi32, #tpu.memory_space<smem>>) -> (i32, i32) {
    %c0_i32 = arith.constant 0 : i32
    %c0_i32_0 = arith.constant 0 : i32
    return %c0_i32, %arg1 : i32, i32
  }
  func.func @transform_4(%arg0: i32, %arg1: i32, %arg2: memref<2x2xi32, #tpu.memory_space<smem>>) -> (i32, i32, i32) {
    %c0_i32 = arith.constant 0 : i32
    %c0_i32_0 = arith.constant 0 : i32
    return %arg0, %c0_i32, %arg1 : i32, i32, i32
  }
  func.func @transform_5(%arg0: i32, %arg1: i32, %arg2: memref<2x2xi32, #tpu.memory_space<smem>>) -> (i32, i32, i32) {
    %c0_i32 = arith.constant 0 : i32
    %c0_i32_0 = arith.constant 0 : i32
    return %arg0, %c0_i32, %arg1 : i32, i32, i32
  }
}

</mosaic_0001>

<llo_original>
// kernel: tpu_custom_call.1
$region0: #{tpu_custom_call.1}
  #allocation0 [shape = 'u32[]', space=smem, size = 0x4, offset = 0x4, fixed_abs, tag = 'smem constant byte address 0x4 - core index']
  #allocation1 [shape = 'u32[144,128]{1,0:T(1,128)}', space=vmem, size = 0x12000, scoped, tag = 'internal scratch']
  #allocation2 [shape = 's32[1]{0}', space=sflag, size = 0x4, scoped, tag = 'scoped memory for tpu_custom_call.1']
  #allocation3 [shape = 'u8[1024]{0}', space=smem, size = 0x400, scoped, tag = 'prefetched SMEM operand 0']
  %s0 = inlined_call_operand.hbm [shape: s32[2,2], index: 0, kind: input, shape index: {}]
  %s1 = inlined_call_operand.hbm [shape: f32[2,4,256], index: 1, kind: input, shape index: {}]
  %s2 = inlined_call_operand.hbm [shape: f32[2,4,256], index: 2, kind: input, shape index: {}]
  %s3 = inlined_call_operand.vmem [shape: f32[2,1,256], index: 3, kind: input, shape index: {}]
  %s4 = inlined_call_operand.hbm [shape: f32[4,256], index: 4, kind: input, shape index: {}]
  %s5 = inlined_call_operand.hbm [shape: f32[2,4,256], index: 5, kind: output, shape index: {0}]
  %s6 = inlined_call_operand.hbm [shape: f32[2,4,256], index: 6, kind: output, shape index: {1}]
  %7 = xla_tuple %s5, %s6
  %s8 = sld [smem:[#allocation0]]
  $region69: #{tpu_custom_call.1} parent=0
    _
  %s10 = ssub.s32 1, %s8
  %s11 = scalar_select 0, %s10, %s8
  %13 = dma.hbm_to_smem %s0, 32, [#allocation3], [#allocation2]
  %14 = dma.done [#allocation2], 32
  %15 = sfence
  $region1: #{tpu_custom_call.1} parent=0
    #allocation4 [shape = 'u8[8192]{0}', space=vmem, size = 0x2000, scoped, tag = 'input window, operand 1']
    #allocation5 [shape = 's32[2]{0}', space=sflag, size = 0x8, scoped, tag = 'scoped memory for tpu_custom_call.1']
    #allocation6 [shape = 's32[2]{0}', space=sflag, size = 0x8, scoped, tag = 'scoped memory for tpu_custom_call.1']
    #allocation7 [shape = 'u8[8192]{0}', space=vmem, size = 0x2000, scoped, tag = 'input window, operand 2']
    #allocation8 [shape = 's32[2]{0}', space=sflag, size = 0x8, scoped, tag = 'scoped memory for tpu_custom_call.1']
    #allocation9 [shape = 'u8[4096]{0}', space=vmem, size = 0x1000, scoped, tag = 'input window, operand 4, single buffered']
    #allocation10 [shape = 'u8[8192]{0}', space=vmem, size = 0x2000, scoped, tag = 'output window, operand 0']
    #allocation11 [shape = 'u8[8192]{0}', space=vmem, size = 0x2000, scoped, tag = 'output window, operand 1']
    #allocation12 [shape = 's32[2]{0}', space=sflag, size = 0x8, scoped, tag = 'scoped memory for tpu_custom_call.1']
    %16 = vsyncpa [#allocation5], 0
    %s17 = scalar_lea.sflag [#allocation5], 1
    %18 = vsyncpa %s17, 0
    %19 = vsyncpa [#allocation8], 0
    %s20 = scalar_lea.sflag [#allocation8], 1
    %21 = vsyncpa %s20, 0
    %22 = vsyncpa [#allocation6], 0
    %s23 = scalar_lea.sflag [#allocation6], 1
    %24 = vsyncpa %s23, 0
    %25 = vsyncpa [#allocation12], 0
    %s26 = scalar_lea.sflag [#allocation12], 1
    %27 = vsyncpa %s26, 0
    loop: start=0, step=1, limit=4
    $region2: #{tpu_custom_call.1} parent=1 // loop_pre_header
      _
    $region3: #{tpu_custom_call.1} parent=1 // loop_header
      %s29 = sphi 0, %s33
      %p30 = scmp.ge.s32.totalorder %s29, 4
      %s36 = sphi 0, %s48
      %s37 = sphi 0, %s44
      %s38 = sphi 0, %s36
      %s39 = sphi 0, %s37
      %s40 = sphi 0, %s38
      %s41 = sphi 0, %s39
      %s53 = sphi 0, %s55
      %s56 = sphi 0, %s53
      %s57 = sphi 0, %s56
      %s73 = sphi 0, %s57
      %s81 = sphi 0, %s83
      %s84 = sphi 0, %s81
      %s85 = sphi 0, %s84
      %s101 = sphi 0, %s85
      %s109 = sphi 0, %s111
      %s112 = sphi 0, %s109
      %s113 = sphi 0, %s112
      %s129 = sphi 0, %s113
      %s135 = sphi 0, %s137
      %s138 = sphi 0, %s135
      %s139 = sphi 0, %s138
      %s155 = sphi 0, %s139
      %s163 = sphi 0, %s165
      %s166 = sphi 0, %s163
      %s167 = sphi 0, %s166
      %s183 = sphi 0, %s167
      %s191 = sphi 0, %s193
      %s194 = sphi 0, %s191
      %s195 = sphi 0, %s194
      %s211 = sphi 0, %s195
    $region4: #{tpu_custom_call.1} parent=1 // loop_header_branch
      %32 = sbr.rel (%p30) target = $region8
    $region5: #{tpu_custom_call.1} parent=1 // loop_body
      %s34 = ssub.s32 %s29, 1
      %s35 = ssub.s32 %s29, 2
      %s42 = sadd.s32 1, %s37
      %p43 = scmp.ge.s32.totalorder %s42, 1
      %s44 = scalar_select %p43, 0, %s42
      %s45 = sadd.s32 1, %s36
      %s46 = scalar_select %p43, %s45, %s36
      %p47 = scmp.ge.s32.totalorder %s46, 2
      %s48 = scalar_select %p47, 0, %s46
      %s49 = ssub.s32 %s36, %s48
      %s50 = ssub.s32 %s37, %s44
      %s51 = sor.u32 %s49, %s50
      %p52 = scmp.eq.s32.totalorder %s51, 0
      %s54 = sadd.s32 %s53, 1
      %s55 = scalar_select %p52, %s53, %s54
      %p58 = pneg %p52
      %p59 = scmp.eq.s32.totalorder %s29, 1
      %p60 = por %p58, %p59
      %p61 = scmp.ne.s32.totalorder %s53, %s56
      %p62 = scmp.eq.s32.totalorder %s29, 0
      %p63 = por %p61, %p62
      %p64 = scmp.ne.s32.totalorder %s53, %s56
      %p65 = scmp.eq.s32.totalorder %s34, 1
      %p66 = por %p64, %p65
      %p67 = scmp.ne.s32.totalorder %s56, %s57
      %p68 = scmp.eq.s32.totalorder %s34, 0
      %p69 = por %p67, %p68
      %p70 = scmp.ne.s32.totalorder %s56, %s57
      %p71 = scmp.eq.s32.totalorder %s35, 1
      %p72 = por %p70, %p71
      %p74 = scmp.ne.s32.totalorder %s57, %s73
      %p75 = scmp.eq.s32.totalorder %s35, 0
      %p76 = por %p74, %p75
      %s77 = ssub.s32 %s36, %s48
      %s78 = ssub.s32 %s37, %s44
      %s79 = sor.u32 %s77, %s78
      %p80 = scmp.eq.s32.totalorder %s79, 0
      %s82 = sadd.s32 %s81, 1
      %s83 = scalar_select %p80, %s81, %s82
      %p86 = pneg %p80
      %p87 = scmp.eq.s32.totalorder %s29, 1
      %p88 = por %p86, %p87
      %p89 = scmp.ne.s32.totalorder %s81, %s84
      %p90 = scmp.eq.s32.totalorder %s29, 0
      %p91 = por %p89, %p90
      %p92 = scmp.ne.s32.totalorder %s81, %s84
      %p93 = scmp.eq.s32.totalorder %s34, 1
      %p94 = por %p92, %p93
      %p95 = scmp.ne.s32.totalorder %s84, %s85
      %p96 = scmp.eq.s32.totalorder %s34, 0
      %p97 = por %p95, %p96
      %p98 = scmp.ne.s32.totalorder %s84, %s85
      %p99 = scmp.eq.s32.totalorder %s35, 1
      %p100 = por %p98, %p99
      %p102 = scmp.ne.s32.totalorder %s85, %s101
      %p103 = scmp.eq.s32.totalorder %s35, 0
      %p104 = por %p102, %p103
      %s105 = ssub.s32 %s36, %s48
      %s106 = ssub.s32 %s37, %s44
      %s107 = sor.u32 %s105, %s106
      %p108 = scmp.eq.s32.totalorder %s107, 0
      %s110 = sadd.s32 %s109, 1
      %s111 = scalar_select %p108, %s109, %s110
      %p114 = pneg %p108
      %p115 = scmp.eq.s32.totalorder %s29, 1
      %p116 = por %p114, %p115
      %p117 = scmp.ne.s32.totalorder %s109, %s112
      %p118 = scmp.eq.s32.totalorder %s29, 0
      %p119 = por %p117, %p118
      %p120 = scmp.ne.s32.totalorder %s109, %s112
      %p121 = scmp.eq.s32.totalorder %s34, 1
      %p122 = por %p120, %p121
      %p123 = scmp.ne.s32.totalorder %s112, %s113
      %p124 = scmp.eq.s32.totalorder %s34, 0
      %p125 = por %p123, %p124
      %p126 = scmp.ne.s32.totalorder %s112, %s113
      %p127 = scmp.eq.s32.totalorder %s35, 1
      %p128 = por %p126, %p127
      %p130 = scmp.ne.s32.totalorder %s113, %s129
      %p131 = scmp.eq.s32.totalorder %s35, 0
      %p132 = por %p130, %p131
      %s133 = ssub.s32 %s37, %s44
      %p134 = scmp.eq.s32.totalorder %s133, 0
      %s136 = sadd.s32 %s135, 1
      %s137 = scalar_select %p134, %s135, %s136
      %p140 = pneg %p134
      %p141 = scmp.eq.s32.totalorder %s29, 1
      %p142 = por %p140, %p141
      %p143 = scmp.ne.s32.totalorder %s135, %s138
      %p144 = scmp.eq.s32.totalorder %s29, 0
      %p145 = por %p143, %p144
      %p146 = scmp.ne.s32.totalorder %s135, %s138
      %p147 = scmp.eq.s32.totalorder %s34, 1
      %p148 = por %p146, %p147
      %p149 = scmp.ne.s32.totalorder %s138, %s139
      %p150 = scmp.eq.s32.totalorder %s34, 0
      %p151 = por %p149, %p150
      %p152 = scmp.ne.s32.totalorder %s138, %s139
      %p153 = scmp.eq.s32.totalorder %s35, 1
      %p154 = por %p152, %p153
      %p156 = scmp.ne.s32.totalorder %s139, %s155
      %p157 = scmp.eq.s32.totalorder %s35, 0
      %p158 = por %p156, %p157
      %s159 = ssub.s32 %s36, %s48
      %s160 = ssub.s32 %s37, %s44
      %s161 = sor.u32 %s159, %s160
      %p162 = scmp.eq.s32.totalorder %s161, 0
      %s164 = sadd.s32 %s163, 1
      %s165 = scalar_select %p162, %s163, %s164
      %p168 = pneg %p162
      %p169 = scmp.eq.s32.totalorder %s29, 1
      %p170 = por %p168, %p169
      %p171 = scmp.ne.s32.totalorder %s163, %s166
      %p172 = scmp.eq.s32.totalorder %s29, 0
      %p173 = por %p171, %p172
      %p174 = scmp.ne.s32.totalorder %s163, %s166
      %p175 = scmp.eq.s32.totalorder %s34, 1
      %p176 = por %p174, %p175
      %p177 = scmp.ne.s32.totalorder %s166, %s167
      %p178 = scmp.eq.s32.totalorder %s34, 0
      %p179 = por %p177, %p178
      %p180 = scmp.ne.s32.totalorder %s166, %s167
      %p181 = scmp.eq.s32.totalorder %s35, 1
      %p182 = por %p180, %p181
      %p184 = scmp.ne.s32.totalorder %s167, %s183
      %p185 = scmp.eq.s32.totalorder %s35, 0
      %p186 = por %p184, %p185
      %s187 = ssub.s32 %s36, %s48
      %s188 = ssub.s32 %s37, %s44
      %s189 = sor.u32 %s187, %s188
      %p190 = scmp.eq.s32.totalorder %s189, 0
      %s192 = sadd.s32 %s191, 1
      %s193 = scalar_select %p190, %s191, %s192
      %p196 = pneg %p190
      %p197 = scmp.eq.s32.totalorder %s29, 1
      %p198 = por %p196, %p197
      %p199 = scmp.ne.s32.totalorder %s191, %s194
      %p200 = scmp.eq.s32.totalorder %s29, 0
      %p201 = por %p199, %p200
      %p202 = scmp.ne.s32.totalorder %s191, %s194
      %p203 = scmp.eq.s32.totalorder %s34, 1
      %p204 = por %p202, %p203
      %p205 = scmp.ne.s32.totalorder %s194, %s195
      %p206 = scmp.eq.s32.totalorder %s34, 0
      %p207 = por %p205, %p206
      %p208 = scmp.ne.s32.totalorder %s194, %s195
      %p209 = scmp.eq.s32.totalorder %s35, 1
      %p210 = por %p208, %p209
      %p212 = scmp.ne.s32.totalorder %s195, %s211
      %p213 = scmp.eq.s32.totalorder %s35, 0
      %p214 = por %p212, %p213
      %p215 = scmp.le.s32.totalorder 1, %s29
      %p216 = scmp.lt.s32.totalorder %s29, 3
      %p217 = pnand %p215, %p216
      %p218 = pneg %p217
      // Predicated region
      $region9: #{tpu_custom_call.1} parent=5 // pred_check
        _
      $region10: #{tpu_custom_call.1} parent=5 // pred_check_branch
        %220 = sbr.rel (%p217) target = $region12
      $region11: #{tpu_custom_call.1} parent=5 // pred_region
        %s221 = ssub.s32 %s29, 1
        // Predicated region
        $region13: #{tpu_custom_call.1} parent=11 // pred_check
          %p222 = pneg %p151
        $region14: #{tpu_custom_call.1} parent=11 // pred_check_branch
          %224 = sbr.rel (%p222) target = $region16
        $region15: #{tpu_custom_call.1} parent=11 // pred_region
          %s225 = smul.u32 2, %s39
          %s227 = ssub.s32 128, 128
          %228 = vsyncadd [#allocation8], %s227
          %s229 = smul.addr %s225, 64
          %s230 = scalar_lea.hbm %s4, %s229
          %s232 = sshll.u32 [#allocation9], 4
          %s233 = int_to_ptr.vmem [resolvable:$true] %s232
          %235 = dma.hbm_to_vmem [thread:$0]  %s230, 128, %s233, [#allocation8]
        $region16: #{tpu_custom_call.1} parent=11 // pred_fallthru
          _
      $region12: #{tpu_custom_call.1} parent=5 // pred_fallthru
        _
      %p236 = scmp.lt.s32.totalorder %s29, 2
      // Predicated region
      $region17: #{tpu_custom_call.1} parent=5 // pred_check
        %p237 = pneg %p236
      $region18: #{tpu_custom_call.1} parent=5 // pred_check_branch
        %239 = sbr.rel (%p237) target = $region20
      $region19: #{tpu_custom_call.1} parent=5 // pred_region
        // Predicated region
        $region21: #{tpu_custom_call.1} parent=19 // pred_check
          %p240 = pneg %p63
        $region22: #{tpu_custom_call.1} parent=19 // pred_check_branch
          %242 = sbr.rel (%p240) target = $region24
        $region23: #{tpu_custom_call.1} parent=19 // pred_region
          %s243 = sand.u32 %s53, 1
          %s244 = scalar_lea.sflag [#allocation5], %s243
          %s245 = sand.u32 %s53, 1
          %s246 = smul.addr %s245, 8
          %s247 = scalar_lea.vmem [#allocation4], %s246
          %s248 = smul.u32 2, %s37
          %s250 = ssub.s32 128, 128
          %251 = vsyncadd %s244, %s250
          %s252 = smul.addr %s36, 2
          %s253 = sadd.s32 %s248, %s252
          %s254 = smul.addr %s253, 64
          %s255 = scalar_lea.hbm %s1, %s254
          %s257 = sshll.u32 %s247, 4
          %s258 = int_to_ptr.vmem [resolvable:$true] %s257
          %260 = dma.hbm_to_vmem [thread:$0]  %s255, 128, %s258, %s244
        $region24: #{tpu_custom_call.1} parent=19 // pred_fallthru
          _
        // Predicated region
        $region25: #{tpu_custom_call.1} parent=19 // pred_check
          %p261 = pneg %p91
        $region26: #{tpu_custom_call.1} parent=19 // pred_check_branch
          %263 = sbr.rel (%p261) target = $region28
        $region27: #{tpu_custom_call.1} parent=19 // pred_region
          %s264 = sand.u32 %s29, 1
          %s265 = scalar_lea.sflag [#allocation8], %s264
          %s266 = sand.u32 %s81, 1
          %s267 = smul.addr %s266, 8
          %s268 = scalar_lea.vmem [#allocation7], %s267
          %s269 = smul.u32 2, %s37
          %s271 = ssub.s32 128, 128
          %272 = vsyncadd %s265, %s271
          %s273 = smul.addr %s36, 2
          %s274 = sadd.s32 %s269, %s273
          %s275 = smul.addr %s274, 64
          %s276 = scalar_lea.hbm %s2, %s275
          %s278 = sshll.u32 %s268, 4
          %s279 = int_to_ptr.vmem [resolvable:$true] %s278
          %281 = dma.hbm_to_vmem [thread:$0]  %s276, 128, %s279, %s265
        $region28: #{tpu_custom_call.1} parent=19 // pred_fallthru
          _
        // Predicated region
        $region29: #{tpu_custom_call.1} parent=19 // pred_check
          %p282 = pneg %p119
        $region30: #{tpu_custom_call.1} parent=19 // pred_check_branch
          %284 = sbr.rel (%p282) target = $region32
        $region31: #{tpu_custom_call.1} parent=19 // pred_region
          %s285 = smul.u32 2, %s37
          %p286 = scmp.lt.s32.totalorder %s36, 1
          %s287 = scalar_select %p286, %s36, 1
          %p288 = scmp.lt.s32.totalorder %s285, 1
          %s289 = scalar_select %p288, %s285, 1
          %s290 = smul.addr %s287, 2
          %s291 = sadd.s32 %s289, %s290
          %s292 = scalar_lea.vmem %s3, %s291
          %s293 = smul.u32 2, %s37
        $region32: #{tpu_custom_call.1} parent=19 // pred_fallthru
          _
      $region20: #{tpu_custom_call.1} parent=5 // pred_fallthru
        _
      %p294 = scmp.le.s32.totalorder 1, %s29
      %p295 = scmp.lt.s32.totalorder %s29, 3
      %p296 = pnand %p294, %p295
      %p297 = pneg %p296
      // Predicated region
      $region33: #{tpu_custom_call.1} parent=5 // pred_check
        _
      $region34: #{tpu_custom_call.1} parent=5 // pred_check_branch
        %299 = sbr.rel (%p296) target = $region36
      $region35: #{tpu_custom_call.1} parent=5 // pred_region
        %s300 = ssub.s32 %s29, 1
        %s301 = sand.u32 %s56, 1
        %s302 = scalar_lea.sflag [#allocation5], %s301
        %s303 = sand.u32 %s56, 1
        %s304 = smul.addr %s303, 8
        %s305 = scalar_lea.vmem [#allocation4], %s304
        // Predicated region
        $region37: #{tpu_custom_call.1} parent=35 // pred_check
          %p306 = pneg %p69
        $region38: #{tpu_custom_call.1} parent=35 // pred_check_branch
          %308 = sbr.rel (%p306) target = $region40
        $region39: #{tpu_custom_call.1} parent=35 // pred_region
          %309 = dma.done %s302, 128
        $region40: #{tpu_custom_call.1} parent=35 // pred_fallthru
          _
        %s310 = sand.u32 %s34, 1
        %s311 = scalar_lea.sflag [#allocation8], %s310
        %s312 = sand.u32 %s84, 1
        %s313 = smul.addr %s312, 8
        %s314 = scalar_lea.vmem [#allocation7], %s313
        // Predicated region
        $region41: #{tpu_custom_call.1} parent=35 // pred_check
          %p315 = pneg %p97
        $region42: #{tpu_custom_call.1} parent=35 // pred_check_branch
          %317 = sbr.rel (%p315) target = $region44
        $region43: #{tpu_custom_call.1} parent=35 // pred_region
          %318 = dma.done %s311, 128
        $region44: #{tpu_custom_call.1} parent=35 // pred_fallthru
          _
        // Predicated region
        $region45: #{tpu_custom_call.1} parent=35 // pred_check
          %p319 = pneg %p151
        $region46: #{tpu_custom_call.1} parent=35 // pred_check_branch
          %321 = sbr.rel (%p319) target = $region48
        $region47: #{tpu_custom_call.1} parent=35 // pred_region
          %322 = dma.done [#allocation8], 128
        $region48: #{tpu_custom_call.1} parent=35 // pred_fallthru
          _
        %s323 = sand.u32 %s56, 1
        %s324 = scalar_lea.sflag [#allocation5], %s323
        %s325 = sand.u32 %s56, 1
        %s326 = smul.addr %s325, 8
        %s327 = scalar_lea.vmem [#allocation4], %s326
        %p328 = pneg %p69
        %p329 = pneg %p66
        %s330 = sand.u32 %s34, 1
        %s331 = scalar_lea.sflag [#allocation8], %s330
        %s332 = sand.u32 %s84, 1
        %s333 = smul.addr %s332, 8
        %s334 = scalar_lea.vmem [#allocation7], %s333
        %p335 = pneg %p97
        %p336 = pneg %p94
        %s337 = smul.u32 2, %s39
        %p338 = scmp.lt.s32.totalorder %s38, 1
        %s339 = scalar_select %p338, %s38, 1
        %p340 = scmp.lt.s32.totalorder %s337, 1
        %s341 = scalar_select %p340, %s337, 1
        %s342 = smul.addr %s339, 2
        %s343 = sadd.s32 %s341, %s342
        %s344 = scalar_lea.vmem %s3, %s343
        %p345 = pneg %p125
        %p346 = pneg %p122
        %p347 = pneg %p151
        %p348 = pneg %p148
        %p349 = pneg %p179
        %p350 = pneg %p176
        %s351 = sand.u32 %s166, 1
        %s352 = scalar_lea.sflag [#allocation6], %s351
        %s353 = sand.u32 %s166, 1
        %s354 = smul.addr %s353, 8
        %s355 = scalar_lea.vmem [#allocation10], %s354
        %p356 = pneg %p207
        %p357 = pneg %p204
        %s358 = sand.u32 %s194, 1
        %s359 = scalar_lea.sflag [#allocation12], %s358
        %s360 = sand.u32 %s194, 1
        %s361 = smul.addr %s360, 8
        %s362 = scalar_lea.vmem [#allocation11], %s361
        %s363 = smul.u32 2, %s39
        %s364 = smul.u32 2, %s39
        %s365 = smul.u32 2, %s39
        %p366 = scmp.lt.s32.totalorder %s38, 1
        %s367 = scalar_select %p366, %s38, 1
        %p368 = scmp.lt.s32.totalorder %s365, 1
        %s369 = scalar_select %p368, %s365, 1
        %s370 = smul.addr %s367, 2
        %s371 = sadd.s32 %s369, %s370
        %s372 = scalar_lea.vmem %s3, %s371
        %s373 = smul.u32 2, %s39
        %s374 = smul.u32 2, %s39
        %s375 = smul.u32 2, %s39
        %s376 = smul.u32 2, %s39
        %v377 = vld [vmem:[%s305] sm:$0xff]
        %v378 = vld [vmem:[%s314] sm:$0xff]
        %v379 = vld [vmem:[%s372] sm:$0x3]
        %v380 = vld [vmem:[#allocation9] sm:$0xff]
        %v381 = vxor.u32 %v377, 2147483648
        %v382 = vmul.f32 %v381, 1.442695
        %v383 = vpow.pop %v382
        %v384 = vadd.f32 %v383, 1.0
        %v385 = vrcp.pop %v384
        %v386 = vmul.f32 1.0, %v385
        %v387 = vxor.u32 %v379, 2147483648
        %v388 = vmul.f32 %v387, 1.442695
        %v389 = vpow.pop %v388
        %v390 = vadd.f32 %v389, 1.0
        %v391 = vrcp.pop %v390
        %v392 = vmul.f32 1.0, %v391
        %vm393 = vcmp.gt.f32.partialorder %v386, 0.3
        %v395 = vlaneseq
        %v396 = vshrl.u32 %v395, 7
        %v397 = vsub.s32 0, %v396
        %v398 = vrot.slane %v392, %v397
        %v399 = vlaneseq
        %v400 = vshrl.u32 %v399, 7
        %v401 = vsub.s32 1, %v400
        %v402 = vrot.slane %v392, %v401
        %v403 = vcombine.low %v398, %v402
        %v405 = vmul.f32 %v386, %v403
        %v406 = vrsqrt.pop %v405
        %v407 = vmul.f32 %v405, %v406
        %vm408 = vcmp.eq.f32.partialorder %v405, inf
        %v409 = vsel %vm408, %v405, %v407
        %vm410 = vcmp.eq.f32.partialorder %v405, 0.0
        %v411 = vand.u32 %v405, 2147483648
        %v412 = vsel %vm410, %v411, %v409
        %v413 = vsel %vm393, %v412, 0.0
        %414 = vst [vmem:[%s355] sm:$0xff] %v413
        %s415 = smul.u32 %s38, 128
        %s416 = sld [smem:[#allocation3 + %s415]]
        %s417 = scvt.s32.f32 %s416
        %s418 = sadd.s32 %s415, 1
        %s419 = sld [smem:[#allocation3 + %s418]]
        %s420 = scvt.s32.f32 %s419
        %v421 = vlaneseq
        %v422 = vshrl.u32 %v421, 7
        %vm423 = vcmp.lt.s32.totalorder %v422, 2
        %v424 = vsel %vm423, -1.0, 1.0
        %vm425 = vcmp.lt.s32.totalorder %v422, 0
        %v426 = vsub.s32 0, %v422
        %v427 = vsel %vm425, %v426, %v422
        %v428 = vshrl.u32 %v427, 1
        %v429 = vand.u32 %v427, 1
        %v430 = vsub.s32 0, %v429
        %v431 = vsel %vm425, %v430, %v429
        %vm432 = vcmp.ne.s32.totalorder %v431, 0
        %vm433 = vcmp.lt.s32.totalorder %v431, 0
        %vm434 = vmand %vm433, %vm432
        %v435 = vadd.s32 %v431, 2
        %v436 = vsel %vm434, %v435, %v431
        %vm437 = vcmp.eq.s32.totalorder %v436, 0
        %s438 = ssub.f32 %s420, 1.0
        %s439 = ssub.f32 %s417, 1.0
        %v440 = vstv %s438
        %v441 = vstv %s439
        %v442 = vsel %vm437, %v440, %v441
        %v444 = vcombine.high %v378, %v378
        %v446 = vmul.f32 %v424, %v378
        %v447 = vmul.f32 %v424, %v444
        %v450 = vcombine.low %v446, %v447
        %v452 = vadd.f32 %v380, %v450
        %v453 = vmax.f32 %v452, 0.0
        %v456 = vunpack.c.l.s4 839922192
        %v457 = vunpack.c.0.s8 %v456
        %v458 = vlaneseq
        %v459 = vshrl.u32 %v458, 7
        %v460 = vsub.s32 %v457, %v459
        %v461 = vrot.slane %v442, %v460
        %v463 = vmin.f32 %v453, %v461
        %464 = vst [vmem:[%s362] sm:$0xff] %v463
        %s465 = sand.u32 %s166, 1
        %s466 = scalar_lea.sflag [#allocation6], %s465
        %s467 = sand.u32 %s166, 1
        %s468 = smul.addr %s467, 8
        %s469 = scalar_lea.vmem [#allocation10], %s468
        %s470 = sand.u32 %s194, 1
        %s471 = scalar_lea.sflag [#allocation12], %s470
        %s472 = sand.u32 %s194, 1
        %s473 = smul.addr %s472, 8
        %s474 = scalar_lea.vmem [#allocation11], %s473
        // Predicated region
        $region49: #{tpu_custom_call.1} parent=35 // pred_check
          %p475 = pneg %p176
        $region50: #{tpu_custom_call.1} parent=35 // pred_check_branch
          %477 = sbr.rel (%p475) target = $region52
        $region51: #{tpu_custom_call.1} parent=35 // pred_region
          %s478 = smul.u32 2, %s39
          %s480 = ssub.s32 128, 128
          %481 = vsyncadd %s466, %s480
          %s482 = smul.addr %s38, 2
          %s483 = sadd.s32 %s478, %s482
          %s484 = smul.addr %s483, 64
          %s485 = scalar_lea.hbm %s5, %s484
          %s487 = sshll.u32 %s469, 4
          %s488 = int_to_ptr.vmem [resolvable:$true] %s487
          %490 = dma.vmem_to_hbm [thread:$0]  %s488, 128, %s485, %s466
        $region52: #{tpu_custom_call.1} parent=35 // pred_fallthru
          _
        // Predicated region
        $region53: #{tpu_custom_call.1} parent=35 // pred_check
          %p491 = pneg %p204
        $region54: #{tpu_custom_call.1} parent=35 // pred_check_branch
          %493 = sbr.rel (%p491) target = $region56
        $region55: #{tpu_custom_call.1} parent=35 // pred_region
          %s494 = smul.u32 2, %s39
          %s496 = ssub.s32 128, 128
          %497 = vsyncadd %s471, %s496
          %s498 = smul.addr %s38, 2
          %s499 = sadd.s32 %s494, %s498
          %s500 = smul.addr %s499, 64
          %s501 = scalar_lea.hbm %s6, %s500
          %s503 = sshll.u32 %s474, 4
          %s504 = int_to_ptr.vmem [resolvable:$true] %s503
          %506 = dma.vmem_to_hbm [thread:$0]  %s504, 128, %s501, %s471
        $region56: #{tpu_custom_call.1} parent=35 // pred_fallthru
          _
      $region36: #{tpu_custom_call.1} parent=5 // pred_fallthru
        _
      %p507 = scmp.le.s32.totalorder 2, %s29
      // Predicated region
      $region57: #{tpu_custom_call.1} parent=5 // pred_check
        %p508 = pneg %p507
      $region58: #{tpu_custom_call.1} parent=5 // pred_check_branch
        %510 = sbr.rel (%p508) target = $region60
      $region59: #{tpu_custom_call.1} parent=5 // pred_region
        %s511 = ssub.s32 %s29, 2
        // Predicated region
        $region61: #{tpu_custom_call.1} parent=59 // pred_check
          %p512 = pneg %p182
        $region62: #{tpu_custom_call.1} parent=59 // pred_check_branch
          %514 = sbr.rel (%p512) target = $region64
        $region63: #{tpu_custom_call.1} parent=59 // pred_region
          %s515 = sand.u32 %s167, 1
          %s516 = scalar_lea.sflag [#allocation6], %s515
          %s517 = sand.u32 %s167, 1
          %s518 = smul.addr %s517, 8
          %s519 = scalar_lea.vmem [#allocation10], %s518
          %520 = dma.done %s516, 128
        $region64: #{tpu_custom_call.1} parent=59 // pred_fallthru
          _
        // Predicated region
        $region65: #{tpu_custom_call.1} parent=59 // pred_check
          %p521 = pneg %p210
        $region66: #{tpu_custom_call.1} parent=59 // pred_check_branch
          %523 = sbr.rel (%p521) target = $region68
        $region67: #{tpu_custom_call.1} parent=59 // pred_region
          %s524 = sand.u32 %s195, 1
          %s525 = scalar_lea.sflag [#allocation12], %s524
          %s526 = sand.u32 %s195, 1
          %s527 = smul.addr %s526, 8
          %s528 = scalar_lea.vmem [#allocation11], %s527
          %529 = dma.done %s525, 128
        $region68: #{tpu_custom_call.1} parent=59 // pred_fallthru
          _
      $region60: #{tpu_custom_call.1} parent=5 // pred_fallthru
        _
    $region6: #{tpu_custom_call.1} parent=1 // loop_footer
      %s33 = sadd.s32 1, %s29
    $region7: #{tpu_custom_call.1} parent=1 // loop_footer_branch
      %28 = sbr.rel target = $region3
    $region8: #{tpu_custom_call.1} parent=1 // loop_exit
      _
    %530 = vsyncpa [#allocation5], 1
    %s531 = scalar_lea.sflag [#allocation5], 1
    %532 = vsyncpa %s531, 1
    %533 = vsyncpa [#allocation8], 1
    %s534 = scalar_lea.sflag [#allocation8], 1
    %535 = vsyncpa %s534, 1
    %536 = vsyncpa [#allocation6], 1
    %s537 = scalar_lea.sflag [#allocation6], 1
    %538 = vsyncpa %s537, 1
    %539 = vsyncpa [#allocation12], 1
    %s540 = scalar_lea.sflag [#allocation12], 1
    %541 = vsyncpa %s540, 1

</llo_original>
